<compile_context>
chip_gen: v5e
topology: v5e:2x2
jax: 0.10.0
libtpu: 0.0.40
codegen_flags: <defaults>
</compile_context>

<pallas_src>
import functools
import math

import jax
import jax.numpy as jnp
from jax.experimental import pallas as pl
from jax.experimental.pallas import tpu as pltpu


def _round_up(n, m):
    return ((n + m - 1) // m) * m


def _vmem_capacity_bytes(default=64 * 1024 * 1024):
    """Generation-aware VMEM capacity (falls back to the v7x-safe 64 MiB)."""
    try:
        cap = getattr(pltpu.get_tpu_info(), "vmem_capacity_bytes", None)
        if cap:
            return int(cap)
    except Exception:
        pass
    return default


def _sphere_lse_kernel(x_ref, w_ref, l_out_ref, xn_ref, l_ref, *,
                       scale, matmul_dtype):
    """Accumulates l = sum_c exp(scale*cos(x, w_c) - scale) over class tiles."""
    j = pl.program_id(2)       # class-tile index within this split ("arbitrary")

    @pl.when(j == 0)
    def _init():
        # Normalize x rows once per (split, batch-tile): rsqrt-multiply (EUP) with
        # the logit scale folded into the same multiply, cached in VMEM scratch.
        # rsqrt(max(sumsq, 1e-24)) == 1 / clamp(norm, min=1e-12); zero-padded batch
        # rows stay finite (xn == 0).
        x = x_ref[...].astype(jnp.float32)
        sumsq = jnp.sum(x * x, axis=1, keepdims=True)
        inv = jax.lax.rsqrt(jnp.maximum(sumsq, 1e-24))
        xn_ref[...] = (x * (scale * inv)).astype(matmul_dtype)
        l_ref[...] = jnp.zeros(l_ref.shape, jnp.float32)

    # Scaled cosine logits for this class tile (MXU, f32 accumulation).  Logits are
    # bounded by +-scale, so a fixed logsumexp max of `scale` is used: no running
    # max, no rescale -- exp feeds straight off the MXU result.
    logits = jnp.dot(xn_ref[...], w_ref[...], preferred_element_type=jnp.float32)
    # TODO(synk): on v6e/v7x a bf16 exp roughly doubles EUP throughput when F is
    # small enough that the EUP (not the MXU) is the binding slot.
    l_ref[...] += jnp.sum(jnp.exp(logits - scale), axis=1, keepdims=True)

    @pl.when(j == pl.num_programs(2) - 1)
    def _finalize():
        l_out_ref[...] = l_ref[...]


def ohem_sphere_loss(x, W, label, *, thresh=0.7, scale=14.0,
                     matmul_dtype=jnp.bfloat16, block_b=None, block_c=None):
    """Forward pass of OhemSphereLoss.  Returns a scalar f32 loss."""
    B, F = x.shape
    F_w, C = W.shape
    assert F == F_w
    n_pick = int(B * thresh)
    assert n_pick >= 1, "thresh * batch must select at least one example"

    x32 = x.astype(jnp.float32)
    w32 = W.astype(jnp.float32)

    # --- Hoisted normalizations (O(B*F) / O(F*C), one-shot).
    x_inv = jax.lax.rsqrt(jnp.maximum(jnp.sum(x32 * x32, axis=1, keepdims=True), 1e-24))
    x_n = x32 * x_inv
    w_inv = jax.lax.rsqrt(jnp.maximum(jnp.sum(w32 * w32, axis=0, keepdims=True), 1e-24))
    w_n = w32 * w_inv

    # --- Target logit in the wrapper (gather B columns of w_n + multiply-reduce),
    #     so the kernel's inner loop carries no iota/compare/select and no labels.
    w_label = jnp.take(w_n, label.astype(jnp.int32), axis=1)          # (F, B)
    t = scale * jnp.sum(x_n * w_label.T, axis=1)                      # (B,)

    # --- Generation-aware tiling.
    mm_itemsize = jnp.dtype(matmul_dtype).itemsize
    sub = 16 if mm_itemsize < 4 else 8            # bf16 packs two rows per sublane
    vmem_limit = min(_vmem_capacity_bytes() * 3 // 4, 100 * 1024 * 1024)

    # Batch tile: as large as the budget allows, so W (the dominant HBM stream for
    # C >> B) is streamed once instead of once per batch tile.
    row_bytes = F * (2 * 4 + mm_itemsize)         # f32 x double-buffer + xn scratch
    if block_b is None:
        b_budget = max(vmem_limit // 3, row_bytes * sub)
        block_b = int(min(_round_up(B, sub), 1024,
                          max(sub, (b_budget // row_bytes) // sub * sub)))
    else:
        block_b = int(_round_up(block_b, sub))

    # Class tile: multiple of 256 (full-width MXU passes), sized from what remains
    # after the x tiles plus ~8 MiB of Mosaic-internal headroom.
    if block_c is None:
        col_bytes = 2 * F * mm_itemsize + block_b * 4   # W dbl-buffer + f32 logit col
        avail = max(vmem_limit - block_b * row_bytes - (8 << 20), 256 * col_bytes)
        block_c = int(min(_round_up(C, 256), 4096,
                          max(256, (avail // col_bytes) // 256 * 256)))
    else:
        block_c = int(_round_up(block_c, 128))

    # 2-way class split on the leading "parallel" axis keeps both v7x TensorCores
    # busy when the batch fits one tile; on 1-TC chips it is just a sequential loop.
    n_split = 2 if _round_up(C, block_c) // block_c >= 2 else 1

    B_pad = _round_up(B, block_b)
    C_pad = _round_up(C, n_split * block_c)
    n_bt = B_pad // block_b
    cpt = C_pad // (n_split * block_c)            # class tiles per split
    n_pad_cols = C_pad - C

    x_p = x32 if B_pad == B else jnp.pad(x32, ((0, B_pad - B), (0, 0)))
    w_p = w_n if C_pad == C else jnp.pad(w_n, ((0, 0), (0, C_pad - C)))
    w_p = w_p.astype(matmul_dtype)

    grid = (n_split, n_bt, cpt)
    kernel = functools.partial(_sphere_lse_kernel, scale=float(scale),
                               matmul_dtype=matmul_dtype)

    cost = pl.CostEstimate(
        flops=int(2 * B_pad * F * C_pad + 2 * B_pad * C_pad),
        transcendentals=int(B_pad * C_pad + B_pad),
        # W is re-streamed once per batch tile; x once per class split.
        bytes_accessed=int(n_bt * w_p.size * w_p.dtype.itemsize
                           + n_split * x_p.size * x_p.dtype.itemsize
                           + n_split * B_pad * 4))

    l_parts = pl.pallas_call(
        kernel,
        out_shape=jax.ShapeDtypeStruct((n_split * B_pad, 1), jnp.float32),
        grid_spec=pltpu.PrefetchScalarGridSpec(
            num_scalar_prefetch=0,
            grid=grid,
            in_specs=[
                pl.BlockSpec((block_b, F), lambda s, i, j: (i, 0)),            # x
                pl.BlockSpec((F, block_c), lambda s, i, j: (0, s * cpt + j)),  # w_n
            ],
            out_specs=pl.BlockSpec((block_b, 1), lambda s, i, j: (s * n_bt + i, 0)),
            scratch_shapes=[
                pltpu.VMEM((block_b, F), matmul_dtype),   # cached scaled x_n
                pltpu.VMEM((block_b, 1), jnp.float32),    # running sum l
            ]),
        compiler_params=pltpu.CompilerParams(
            dimension_semantics=("parallel", "parallel", "arbitrary"),
            vmem_limit_bytes=int(vmem_limit)),
        cost_estimate=cost,
    )(x_p, w_p)

    # Combine per-split partial sums; remove the padded-class contribution (zero
    # padded W columns give logits == 0 exactly -> each contributes exp(-scale)).
    l_total = jnp.sum(l_parts.reshape(n_split, B_pad)[:, :B], axis=0)
    if n_pad_cols:
        l_total = jnp.maximum(l_total - n_pad_cols * math.exp(-float(scale)), 1e-30)

    lse = scale + jnp.log(l_total)       # logsumexp with fixed max = scale
    per_example = lse - t                # per-example cross entropy

    # TODO(synk): the OHEM selection (descending sort / top-k over B scalar losses)
    # has no clean Pallas TPU primitive; done with lax.top_k on the tiny (B,) vector.
    hard, _ = jax.lax.top_k(per_example, n_pick)
    return jnp.mean(hard)


def reference_ohem_sphere_loss(x, W, label, *, thresh=0.7, scale=14.0):
    """Pure-JAX reference matching the torch module (f32 throughout)."""
    x = x.astype(jnp.float32)
    W = W.astype(jnp.float32)
    x_n = x / jnp.maximum(jnp.linalg.norm(x, axis=1, keepdims=True), 1e-12)
    w_n = W / jnp.maximum(jnp.linalg.norm(W, axis=0, keepdims=True), 1e-12)
    logits = scale * jnp.dot(x_n, w_n, precision=jax.lax.Precision.HIGHEST)
    logp = jax.nn.log_softmax(logits, axis=-1)
    per_ex = -jnp.take_along_axis(logp, label[:, None].astype(jnp.int32), axis=1)[:, 0]
    n_pick = int(x.shape[0] * thresh)
    hard = jnp.sort(per_ex)[::-1][:n_pick]
    return jnp.mean(hard)


if __name__ == "__main__":
    key = jax.random.PRNGKey(0)

    # (B, in_feats, n_classes, forced block_b/block_c):
    #   1) tiny single-tile case, default tiling.
    #   2) padded-class case with forced small tiles so the 2-way class split,
    #      multi-tile reduction and padding correction are all exercised.
    configs = [
        (8, 32, 16, None, None),
        (64, 128, 600, 32, 256),
    ]

    for (B, in_feats, n_classes, bb, bc) in configs:
        key, k_x, k_w, k_l = jax.random.split(key, 4)
        x = jax.random.normal(k_x, (B, in_feats), dtype=jnp.float32)
        label = jax.random.randint(k_l, (B,), 0, n_classes, dtype=jnp.int32)
        # Deterministic xavier_normal_ init of W (gain=1): std = sqrt(2/(fan_in+fan_out))
        std = (2.0 / (in_feats + n_classes)) ** 0.5
        W = std * jax.random.normal(k_w, (in_feats, n_classes), dtype=jnp.float32)

        ref = reference_ohem_sphere_loss(x, W, label)

        # f32 MXU path vs exact f32 torch semantics (tight).
        loss_f32 = jax.block_until_ready(
            ohem_sphere_loss(x, W, label, matmul_dtype=jnp.float32,
                             block_b=bb, block_c=bc))
        assert jnp.allclose(loss_f32, ref, rtol=2e-4, atol=2e-4), (B, loss_f32, ref)

        # Production path: bf16 MXU operands, f32 accumulation (loose check).
        loss_bf16 = jax.block_until_ready(
            ohem_sphere_loss(x, W, label, matmul_dtype=jnp.bfloat16,
                             block_b=bb, block_c=bc))
        assert jnp.abs(loss_bf16 - ref) < 5e-2, (B, loss_bf16, ref)

    print("KERNEL_OK")
</pallas_src>

<mosaic_0001>
module attributes {stable_mosaic.version = 11 : i64} {
  func.func @_sphere_lse_kernel(%arg0: i32, %arg1: i32, %arg2: i32, %arg3: memref<8x32xf32, #tpu.memory_space<vmem>>, %arg4: memref<32x256xf32, #tpu.memory_space<vmem>>, %arg5: memref<8x1xf32, #tpu.memory_space<vmem>>, %arg6: memref<8x32xf32, #tpu.memory_space<vmem>>, %arg7: memref<8x1xf32, #tpu.memory_space<vmem>>) attributes {dimension_semantics = [#tpu.dimension_semantics<parallel>, #tpu.dimension_semantics<parallel>, #tpu.dimension_semantics<arbitrary>], iteration_bounds = array<i64: 1, 1, 1>, scalar_prefetch = 0 : i64, scratch_operands = 2 : i64, tpu.core_type = #tpu.core_type<tc>, window_params = [{transform_indices = @transform_0, window_bounds = array<i64: 8, 32>}, {transform_indices = @transform_1, window_bounds = array<i64: 32, 256>}, {transform_indices = @transform_2, window_bounds = array<i64: 8, 1>}]} {
    %c0_i32 = arith.constant 0 : i32
    %0 = arith.cmpi eq, %arg2, %c0_i32 : i32
    %1 = arith.extui %0 : i1 to i32
    %c0_i32_0 = arith.constant 0 : i32
    %2 = arith.cmpi ne, %1, %c0_i32_0 : i32
    scf.if %2 {
      %c0_12 = arith.constant 0 : index
      %c0_13 = arith.constant 0 : index
      %17 = vector.load %arg3[%c0_12, %c0_13] : memref<8x32xf32, #tpu.memory_space<vmem>>, vector<8x32xf32>
      %18 = arith.mulf %17, %17 : vector<8x32xf32>
      %cst_14 = arith.constant dense<0.000000e+00> : vector<8xf32>
      %19 = vector.multi_reduction <add>, %18, %cst_14 [1] : vector<8x32xf32> to vector<8xf32>
      %20 = vector.shape_cast %19 : vector<8xf32> to vector<8x1xf32>
      %cst_15 = arith.constant 1.000000e-24 : f32
      %21 = vector.broadcast %cst_15 : f32 to vector<8x1xf32>
      %22 = arith.maximumf %20, %21 : vector<8x1xf32>
      %23 = math.rsqrt %22 : vector<8x1xf32>
      %cst_16 = arith.constant 1.400000e+01 : f32
      %24 = vector.broadcast %cst_16 : f32 to vector<8x1xf32>
      %25 = arith.mulf %24, %23 : vector<8x1xf32>
      %26 = vector.broadcast %25 : vector<8x1xf32> to vector<8x32xf32>
      %27 = arith.mulf %17, %26 : vector<8x32xf32>
      %c0_17 = arith.constant 0 : index
      %c0_18 = arith.constant 0 : index
      %28 = vector.load %arg6[%c0_17, %c0_18] : memref<8x32xf32, #tpu.memory_space<vmem>>, vector<8x32xf32>
      tpu.vector_store %arg6[%c0_17, %c0_18], %27 {strides = array<i32>} : memref<8x32xf32, #tpu.memory_space<vmem>>, vector<8x32xf32>,
      %cst_19 = arith.constant 0.000000e+00 : f32
      %29 = vector.broadcast %cst_19 : f32 to vector<8x1xf32>
      %c0_20 = arith.constant 0 : index
      %c0_21 = arith.constant 0 : index
      %30 = vector.load %arg7[%c0_20, %c0_21] : memref<8x1xf32, #tpu.memory_space<vmem>>, vector<8x1xf32>
      tpu.vector_store %arg7[%c0_20, %c0_21], %29 {strides = array<i32>} : memref<8x1xf32, #tpu.memory_space<vmem>>, vector<8x1xf32>,
    } else {
    }
    %c0 = arith.constant 0 : index
    %c0_1 = arith.constant 0 : index
    %3 = vector.load %arg6[%c0, %c0_1] : memref<8x32xf32, #tpu.memory_space<vmem>>, vector<8x32xf32>
    %c0_2 = arith.constant 0 : index
    %c0_3 = arith.constant 0 : index
    %4 = vector.load %arg4[%c0_2, %c0_3] : memref<32x256xf32, #tpu.memory_space<vmem>>, vector<32x256xf32>
    %cst = arith.constant dense<0.000000e+00> : vector<8x256xf32>
    %5 = tpu.matmul %3, %4, %cst {dimension_numbers = #tpu.dot_dimension_numbers<[1], [0], [0], [1], [0, 0, 1, 1], [], []>} : vector<8x32xf32>, vector<32x256xf32>, vector<8x256xf32> -> vector<8x256xf32>
    %c0_4 = arith.constant 0 : index
    %c0_5 = arith.constant 0 : index
    %6 = vector.load %arg7[%c0_4, %c0_5] : memref<8x1xf32, #tpu.memory_space<vmem>>, vector<8x1xf32>
    %cst_6 = arith.constant 1.400000e+01 : f32
    %7 = vector.broadcast %cst_6 : f32 to vector<8x256xf32>
    %8 = arith.subf %5, %7 : vector<8x256xf32>
    %9 = math.exp %8 : vector<8x256xf32>
    %cst_7 = arith.constant dense<0.000000e+00> : vector<8xf32>
    %10 = vector.multi_reduction <add>, %9, %cst_7 [1] : vector<8x256xf32> to vector<8xf32>
    %11 = vector.shape_cast %10 : vector<8xf32> to vector<8x1xf32>
    %12 = arith.addf %6, %11 : vector<8x1xf32>
    %c0_8 = arith.constant 0 : index
    %c0_9 = arith.constant 0 : index
    %13 = vector.load %arg7[%c0_8, %c0_9] : memref<8x1xf32, #tpu.memory_space<vmem>>, vector<8x1xf32>
    tpu.vector_store %arg7[%c0_8, %c0_9], %12 {strides = array<i32>} : memref<8x1xf32, #tpu.memory_space<vmem>>, vector<8x1xf32>,
    %c0_i32_10 = arith.constant 0 : i32
    %14 = arith.cmpi eq, %arg2, %c0_i32_10 : i32
    %15 = arith.extui %14 : i1 to i32
    %c0_i32_11 = arith.constant 0 : i32
    %16 = arith.cmpi ne, %15, %c0_i32_11 : i32
    scf.if %16 {
      %c0_12 = arith.constant 0 : index
      %c0_13 = arith.constant 0 : index
      %17 = vector.load %arg7[%c0_12, %c0_13] : memref<8x1xf32, #tpu.memory_space<vmem>>, vector<8x1xf32>
      %c0_14 = arith.constant 0 : index
      %c0_15 = arith.constant 0 : index
      %18 = vector.load %arg5[%c0_14, %c0_15] : memref<8x1xf32, #tpu.memory_space<vmem>>, vector<8x1xf32>
      tpu.vector_store %arg5[%c0_14, %c0_15], %17 {strides = array<i32>} : memref<8x1xf32, #tpu.memory_space<vmem>>, vector<8x1xf32>,
    } else {
    }
    return
  }
  func.func @transform_0(%arg0: i32, %arg1: i32, %arg2: i32) -> (i32, i32) {
    %c0_i32 = arith.constant 0 : i32
    %c0_i32_0 = arith.constant 0 : i32
    return %arg1, %c0_i32 : i32, i32
  }
  func.func @transform_1(%arg0: i32, %arg1: i32, %arg2: i32) -> (i32, i32) {
    %c1_i32 = arith.constant 1 : i32
    %0 = arith.muli %arg0, %c1_i32 : i32
    %1 = arith.addi %0, %arg2 : i32
    %c0_i32 = arith.constant 0 : i32
    %c0_i32_0 = arith.constant 0 : i32
    return %c0_i32, %1 : i32, i32
  }
  func.func @transform_2(%arg0: i32, %arg1: i32, %arg2: i32) -> (i32, i32) {
    %c1_i32 = arith.constant 1 : i32
    %0 = arith.muli %arg0, %c1_i32 : i32
    %1 = arith.addi %0, %arg1 : i32
    %c0_i32 = arith.constant 0 : i32
    %c0_i32_0 = arith.constant 0 : i32
    return %1, %c0_i32 : i32, i32
  }
}

</mosaic_0001>

<llo_original>
// kernel: tpu_custom_call.1
$region0: #{tpu_custom_call.1}
  #allocation0 [shape = 'u32[]', space=smem, size = 0x4, offset = 0x4, fixed_abs, tag = 'smem constant byte address 0x4 - core index']
  #allocation1 [shape = 'u32[72,128]{1,0:T(1,128)}', space=vmem, size = 0x9000, scoped, tag = 'internal scratch']
  #allocation2 [shape = 'f32[8,32]{1,0:T(8,128)}', space=vmem, size = 0x1000, scoped, tag = 'scratch operand']
  #allocation3 [shape = 'f32[8,1]{1,0:T(8,128)}', space=vmem, size = 0x1000, scoped, tag = 'scratch operand']
  %s0 = inlined_call_operand.hbm [shape: f32[8,32], index: 0, kind: input, shape index: {}]
  %s1 = inlined_call_operand.hbm [shape: f32[32,256], index: 1, kind: input, shape index: {}]
  %s2 = inlined_call_operand.vmem [shape: f32[8,1], index: 2, kind: output, shape index: {}]
  %s3 = sld [smem:[#allocation0]]
  $region34: #{tpu_custom_call.1} parent=0
    _
  %s5 = ssub.s32 1, %s3
  %s6 = scalar_select 0, %s5, %s3
  $region1: #{tpu_custom_call.1} parent=0
    #allocation4 [shape = 'u8[4096]{0}', space=vmem, size = 0x1000, scoped, tag = 'input window, operand 0, single buffered']
    #allocation5 [shape = 's32[1]{0}', space=sflag, size = 0x4, scoped, tag = 'scoped memory for tpu_custom_call.1']
    #allocation6 [shape = 'u8[32768]{0}', space=vmem, size = 0x8000, scoped, tag = 'input window, operand 1, single buffered']
    #allocation7 [shape = 's32[1]{0}', space=sflag, size = 0x4, scoped, tag = 'scoped memory for tpu_custom_call.1']
    %7 = vsyncpa [#allocation5], 0
    %8 = vsyncpa [#allocation7], 0
    // Predicated region
    $region2: #{tpu_custom_call.1} parent=1 // pred_check
      _
    $region3: #{tpu_custom_call.1} parent=1 // pred_check_branch
      %10 = sbr.rel (0) target = $region5
    $region4: #{tpu_custom_call.1} parent=1 // pred_region
      %12 = vsyncadd [#allocation5], 0
      %s14 = sshll.u32 %s0, 4
      %s15 = int_to_ptr.hbm [resolvable:$true] %s14
      %s16 = sshll.u32 [#allocation4], 4
      %s17 = int_to_ptr.vmem [resolvable:$true] %s16
      %19 = dma.hbm_to_vmem [thread:$0]  %s15, 128, %s17, [#allocation5]
    $region5: #{tpu_custom_call.1} parent=1 // pred_fallthru
      _
    // Predicated region
    $region6: #{tpu_custom_call.1} parent=1 // pred_check
      _
    $region7: #{tpu_custom_call.1} parent=1 // pred_check_branch
      %21 = sbr.rel (0) target = $region9
    $region8: #{tpu_custom_call.1} parent=1 // pred_region
      %s22 = sadd.s32 0, 0
      %s23 = smul.u32 2, %s22
      %25 = vsyncadd [#allocation7], 0
      %s26 = smul.addr %s23, 8
      %s27 = scalar_lea.hbm %s1, %s26
      %s28 = sshll.u32 %s27, 4
      %s29 = int_to_ptr.hbm [resolvable:$true] %s28
      %s30 = sshll.u32 [#allocation6], 4
      %s31 = int_to_ptr.vmem [resolvable:$true] %s30
      %36 = dma.hbm_to_vmem [thread:$0]  %s29, 1024, %s31, [#allocation7], 256, 256, 16
    $region9: #{tpu_custom_call.1} parent=1 // pred_fallthru
      _
    // Predicated region
    $region10: #{tpu_custom_call.1} parent=1 // pred_check
      _
    $region11: #{tpu_custom_call.1} parent=1 // pred_check_branch
      %38 = sbr.rel (0) target = $region13
    $region12: #{tpu_custom_call.1} parent=1 // pred_region
      %40 = dma.done [#allocation5], 128
    $region13: #{tpu_custom_call.1} parent=1 // pred_fallthru
      _
    // Predicated region
    $region14: #{tpu_custom_call.1} parent=1 // pred_check
      _
    $region15: #{tpu_custom_call.1} parent=1 // pred_check_branch
      %42 = sbr.rel (0) target = $region17
    $region16: #{tpu_custom_call.1} parent=1 // pred_region
      %44 = dma.done [#allocation7], 1024
    $region17: #{tpu_custom_call.1} parent=1 // pred_fallthru
      _
    %s45 = sadd.s32 0, 0
    %p46 = scmp.lt.s32.totalorder %s45, 0
    %s47 = scalar_select %p46, %s45, 0
    %s48 = smul.addr %s47, 8
    %s49 = scalar_lea.vmem %s2, %s48
    %s50 = sadd.s32 0, 0
    %s51 = smul.u32 2, %s50
    %s52 = sadd.s32 0, 0
    %p53 = scmp.lt.s32.totalorder %s52, 0
    %s54 = scalar_select %p53, %s52, 0
    %s55 = smul.addr %s54, 8
    %s56 = scalar_lea.vmem %s2, %s55
    %s57 = sadd.s32 0, 0
    %p58 = scmp.eq.s32.totalorder 0, 0
    // Predicated region
    $region18: #{tpu_custom_call.1} parent=1 // pred_check
      %p59 = pneg %p58
    $region19: #{tpu_custom_call.1} parent=1 // pred_check_branch
      %61 = sbr.rel (%p59) target = $region21
    $region20: #{tpu_custom_call.1} parent=1 // pred_region
      %v62 = vld [vmem:[#allocation4] sm:$0xff]
      %v63 = vmul.f32 %v62, %v62
      %vm64 = vcmask 261120
      %v65 = vsel %vm64, %v63, 0.0
      %66 = vadd.xlane.f32.xlu0 %v65
      %v67 = vpop.xlane.xlu0 %66
      %v68 = vmax.f32 %v67, 1e-24
      %v69 = vrsqrt.pop %v68
      %v70 = vmul.f32 %v69, %v68
      %v71 = vmul.f32 %v70, %v69
      %v72 = vmul.f32 0.5, %v71
      %v73 = vsub.f32 1.5, %v72
      %v74 = vmul.f32 %v69, %v73
      %vm75 = vweird.f32 %v68
      %vm76 = vweird.f32 %v69
      %vm77 = vmor %vm75, %vm76
      %v78 = vsel %vm77, %v69, %v74
      %v79 = vmul.f32 %v78, 14.0
      %v80 = vmul.f32 %v62, %v79
      %81 = vst.msk [vmem:[#allocation2] sm:$0xff] %vm64, %v80
      %vm82 = vcmask 7168
      %83 = vst.msk [vmem:[#allocation3] sm:$0xff] %vm82, 0.0
    $region21: #{tpu_custom_call.1} parent=1 // pred_fallthru
      _
    %v84 = vld [vmem:[#allocation2] sm:$0xff]
    %v85 = vld [vmem:[#allocation6] sm:$0xff]
    %v86 = vld [vmem:[#allocation6 + $0x8] sm:$0xff]
    %v87 = vld [vmem:[#allocation6 + $0x10] sm:$0xff]
    %v88 = vld [vmem:[#allocation6 + $0x18] sm:$0xff]
    %v89 = vld [vmem:[#allocation6 + $0x20] sm:$0xff]
    %v90 = vld [vmem:[#allocation6 + $0x28] sm:$0xff]
    %v91 = vld [vmem:[#allocation6 + $0x30] sm:$0xff]
    %v92 = vld [vmem:[#allocation6 + $0x38] sm:$0xff]
    %vm93 = vcmask 261120
    %v95 = vsel %vm93, %v84, 0
    %97 = vmatpush.msra.mxu0 0.0
    %98 = vmatpush.msra.mxu0 0.0
    %99 = vmatpush.msra.mxu0 0.0
    %100 = vmatpush.msra.mxu0 0.0
    %101 = vmatpush.msra.mxu0 0.0
    %102 = vmatpush.msra.mxu0 0.0
    %103 = vmatpush.msra.mxu0 0.0
    %104 = vmatpush.msra.mxu0 0.0
    %105 = vmatpush.msra.mxu0 0.0
    %106 = vmatpush.msra.mxu0 0.0
    %107 = vmatpush.msra.mxu0 0.0
    %108 = vmatpush.msra.mxu0 0.0
    %109 = vmatpush.msra.mxu0 %v91
    %110 = vmatpush.msra.mxu0 %v89
    %111 = vmatpush.msra.mxu0 %v87
    %112 = vmatpush.msra.mxu0 %v85
    %113 = vmatmul.f32.gmra.mxu0 %v95
    %v114 = vpop.f32.mrf.mxu0
    %v115 = vadd.f32 0.0, %v114
    %116 = vdwg.mxu0
    %117 = vmatpush.msra.mxu0 0.0
    %118 = vmatpush.msra.mxu0 0.0
    %119 = vmatpush.msra.mxu0 0.0
    %120 = vmatpush.msra.mxu0 0.0
    %121 = vmatpush.msra.mxu0 0.0
    %122 = vmatpush.msra.mxu0 0.0
    %123 = vmatpush.msra.mxu0 0.0
    %124 = vmatpush.msra.mxu0 0.0
    %125 = vmatpush.msra.mxu0 0.0
    %126 = vmatpush.msra.mxu0 0.0
    %127 = vmatpush.msra.mxu0 0.0
    %128 = vmatpush.msra.mxu0 0.0
    %129 = vmatpush.msra.mxu0 %v92
    %130 = vmatpush.msra.mxu0 %v90
    %131 = vmatpush.msra.mxu0 %v88
    %132 = vmatpush.msra.mxu0 %v86
    %133 = vmatmul.f32.gmra.mxu0 %v95
    %v134 = vpop.f32.mrf.mxu0
    %v135 = vadd.f32 0.0, %v134
    %136 = vdwg.mxu0
    %v137 = vld [vmem:[#allocation3] sm:$0xff]
    %v138 = vsub.f32 %v115, 14.0
    %v139 = vsub.f32 %v135, 14.0
    %v140 = vmul.f32 %v138, 1.442695
    %v141 = vpow.pop %v140
    %v142 = vmul.f32 %v139, 1.442695
    %v143 = vpow.pop %v142
    %v144 = vadd.f32 %v141, %v143
    %145 = vadd.xlane.f32.xlu0 %v144
    %v146 = vpop.xlane.xlu0 %145
    %v147 = vadd.f32 %v137, %v146
    %vm148 = vcmask 7168
    %149 = vst.msk [vmem:[#allocation3] sm:$0xff] %vm148, %v147
    // Predicated region
    $region22: #{tpu_custom_call.1} parent=1 // pred_check
      %p150 = pneg %p58
    $region23: #{tpu_custom_call.1} parent=1 // pred_check_branch
      %152 = sbr.rel (%p150) target = $region25
    $region24: #{tpu_custom_call.1} parent=1 // pred_region
      %v153 = vld [vmem:[#allocation3] sm:$0xff]
      %154 = vst.msk [vmem:[%s56] sm:$0xff] %vm148, %v153
    $region25: #{tpu_custom_call.1} parent=1 // pred_fallthru
      _
    %s155 = sadd.s32 0, 0
    %p156 = scmp.lt.s32.totalorder %s155, 0
    %s157 = scalar_select %p156, %s155, 0
    %s158 = smul.addr %s157, 8
    %s159 = scalar_lea.vmem %s2, %s158
    // Predicated region
    $region26: #{tpu_custom_call.1} parent=1 // pred_check
      _
    $region27: #{tpu_custom_call.1} parent=1 // pred_check_branch
      %161 = sbr.rel (0) target = $region29
    $region28: #{tpu_custom_call.1} parent=1 // pred_region
      %s162 = sadd.s32 0, 0
    $region29: #{tpu_custom_call.1} parent=1 // pred_fallthru
      _
    // Predicated region
    $region30: #{tpu_custom_call.1} parent=1 // pred_check
      _
    $region31: #{tpu_custom_call.1} parent=1 // pred_check_branch
      %164 = sbr.rel (0) target = $region33
    $region32: #{tpu_custom_call.1} parent=1 // pred_region
      %s165 = sadd.s32 0, 0
      %p166 = scmp.lt.s32.totalorder %s165, 0
      %s167 = scalar_select %p166, %s165, 0
      %s168 = smul.addr %s167, 8
      %s169 = scalar_lea.vmem %s2, %s168
    $region33: #{tpu_custom_call.1} parent=1 // pred_fallthru
      _
    %170 = vsyncpa [#allocation5], 1
    %171 = vsyncpa [#allocation7], 1

</llo_original>
